<compile_context>
chip_gen: v6e
topology: v6e:2x2x1
jax: 0.10.0
libtpu: 0.0.40
codegen_flags: <defaults>
</compile_context>

<pallas_src>
import functools
import math

import jax
import jax.numpy as jnp
from jax.experimental import pallas as pl
from jax.experimental.pallas import tpu as pltpu


_S = math.sqrt(2.0 / math.pi)   # sqrt(2/pi)
_C = 0.44715                    # module's exact constant (intentionally NOT 0.044715)
_TWO_S = 2.0 * _S               # folded: 0.5*(1+tanh(z)) == sigmoid(2z)
_TWO_SC = 2.0 * _S * _C

_LANES = 128
_TARGET_BLOCK_ELEMS = 1 << 20        # ~1Mi elems: 4 MiB f32 / 2 MiB bf16 per block
_SMALL_INPUT_BYTES = 1 << 20         # below this, single full-dims block (grid=1)
_VMEM_LIMIT_BYTES = 48 << 20         # headroom for 2x(in+out) double buffers


def _gelu_kernel(x_ref, o_ref):
    xf = x_ref[...].astype(jnp.float32)
    x2 = xf * xf
    # 0.5*x*(1 + tanh(S*(x + C*x^3))) == x * sigmoid(2*S*x + 2*S*C*x^3)
    z = xf * (_TWO_S + _TWO_SC * x2)
    o_ref[...] = (xf * jax.lax.logistic(z)).astype(o_ref.dtype)


def _pick_lane_width(n: int) -> int:
    """Widest lane dim (multiple of 128) that divides n; 128 for ragged n."""
    for w in (8 * _LANES, 4 * _LANES, 2 * _LANES, _LANES):
        if n % w == 0:
            return w
    return _LANES


def _pick_block_rows(rows: int, lane_width: int, itemsize: int) -> int:
    """Balanced, sublane-aligned block rows; guarantees grid>=2 on big inputs."""
    sublane = max(8, 32 // itemsize)           # 8 f32, 16 bf16, 32 int8/fp8
    total_bytes = rows * lane_width * itemsize
    if total_bytes <= _SMALL_INPUT_BYTES or rows <= sublane:
        return rows                            # block == full dims (always legal)
    target_rows = max(sublane, _TARGET_BLOCK_ELEMS // lane_width)
    n_blocks = max(2, pl.cdiv(rows, target_rows))   # >=2 -> v7x megacore sharding
    br = pl.cdiv(rows, n_blocks)
    br = pl.cdiv(br, sublane) * sublane        # sublane-aligned -> unmasked packed vregs
    return min(br, rows)


@functools.partial(jax.jit, static_argnames=())
def gelu_pallas(x: jax.Array) -> jax.Array:
    """Elementwise GELU (tanh approx, coeff 0.44715) via a Pallas TPU kernel."""
    orig_shape = x.shape
    orig_dtype = x.dtype
    n = x.size
    itemsize = jnp.dtype(orig_dtype).itemsize

    lane_width = _pick_lane_width(n)
    n_pad = pl.cdiv(n, lane_width) * lane_width   # no-op unless n isn't lane-aligned

    flat = jnp.ravel(x)
    padded = n_pad != n
    if padded:
        flat = jnp.pad(flat, (0, n_pad - n))

    rows = n_pad // lane_width
    block_rows = _pick_block_rows(rows, lane_width, itemsize)
    grid = (pl.cdiv(rows, block_rows),)           # ragged last block masked by Pallas

    x2d = flat.reshape(rows, lane_width)

    out2d = pl.pallas_call(
        _gelu_kernel,
        out_shape=jax.ShapeDtypeStruct((rows, lane_width), orig_dtype),
        grid_spec=pltpu.PrefetchScalarGridSpec(
            num_scalar_prefetch=0,
            grid=grid,
            in_specs=[pl.BlockSpec((block_rows, lane_width), lambda i: (i, 0))],
            out_specs=pl.BlockSpec((block_rows, lane_width), lambda i: (i, 0)),
        ),
        compiler_params=pltpu.CompilerParams(
            dimension_semantics=("parallel",),     # megacore sharding when grid >= 2
            vmem_limit_bytes=_VMEM_LIMIT_BYTES,
        ),
    )(x2d)

    out_flat = out2d.reshape(-1)
    if padded:
        out_flat = out_flat[:n]
    return out_flat.reshape(orig_shape)


def _gelu_ref(x: jax.Array) -> jax.Array:
    xf = x.astype(jnp.float32)
    return (
        0.5 * xf * (1.0 + jnp.tanh(_S * (xf + _C * xf ** 3)))
    ).astype(x.dtype)


if __name__ == "__main__":
    key = jax.random.PRNGKey(0)

    # Small shape consistent with the module's forward (NCHW-style input).
    x = jax.random.normal(key, (2, 4, 16, 16), dtype=jnp.float32)
    y = gelu_pallas(x)
    jax.block_until_ready(y)
    y_ref = _gelu_ref(x)
    assert y.shape == x.shape and y.dtype == x.dtype
    assert jnp.allclose(y, y_ref, atol=1e-5, rtol=1e-5)

    # Non-lane-aligned (ragged) path: minimal padding + masked single block.
    x_odd = jax.random.normal(jax.random.PRNGKey(1), (3, 5, 7), dtype=jnp.float32)
    y_odd = gelu_pallas(x_odd)
    jax.block_until_ready(y_odd)
    assert jnp.allclose(y_odd, _gelu_ref(x_odd), atol=1e-5, rtol=1e-5)

    # Medium input: exercises the multi-block (grid >= 2), wide-lane path.
    x_med = jax.random.normal(jax.random.PRNGKey(2), (256, 4096), dtype=jnp.float32)
    y_med = gelu_pallas(x_med)
    jax.block_until_ready(y_med)
    assert jnp.allclose(y_med, _gelu_ref(x_med), atol=1e-5, rtol=1e-5)

    # bf16 input: exercises the dtype-aware (16-row sublane) block sizing.
    x_bf = jax.random.normal(jax.random.PRNGKey(3), (2049, 512), dtype=jnp.bfloat16)
    y_bf = gelu_pallas(x_bf)
    jax.block_until_ready(y_bf)
    assert jnp.allclose(
        y_bf.astype(jnp.float32), _gelu_ref(x_bf).astype(jnp.float32),
        atol=2e-2, rtol=2e-2,
    )

    print("KERNEL_OK")
</pallas_src>

<mosaic_0001>
module attributes {stable_mosaic.version = 11 : i64} {
  func.func @_gelu_kernel(%arg0: i32, %arg1: memref<2x1024xf32, #tpu.memory_space<vmem>>, %arg2: memref<2x1024xf32, #tpu.memory_space<vmem>>) attributes {dimension_semantics = [#tpu.dimension_semantics<parallel>], iteration_bounds = array<i64: 1>, scalar_prefetch = 0 : i64, scratch_operands = 0 : i64, tpu.core_type = #tpu.core_type<tc>, window_params = [{transform_indices = @transform_0, window_bounds = array<i64: 2, 1024>}, {transform_indices = @transform_1, window_bounds = array<i64: 2, 1024>}]} {
    %c0 = arith.constant 0 : index
    %c0_0 = arith.constant 0 : index
    %0 = vector.load %arg1[%c0, %c0_0] : memref<2x1024xf32, #tpu.memory_space<vmem>>, vector<2x1024xf32>
    %1 = arith.mulf %0, %0 : vector<2x1024xf32>
    %cst = arith.constant 0.713548183 : f32
    %2 = vector.broadcast %cst : f32 to vector<2x1024xf32>
    %3 = arith.mulf %2, %1 : vector<2x1024xf32>
    %cst_1 = arith.constant 1.59576917 : f32
    %4 = vector.broadcast %cst_1 : f32 to vector<2x1024xf32>
    %5 = arith.addf %4, %3 : vector<2x1024xf32>
    %6 = arith.mulf %0, %5 : vector<2x1024xf32>
    %7 = arith.negf %6 : vector<2x1024xf32>
    %8 = math.exp %7 : vector<2x1024xf32>
    %cst_2 = arith.constant 1.000000e+00 : f32
    %9 = vector.broadcast %cst_2 : f32 to vector<2x1024xf32>
    %10 = arith.addf %9, %8 : vector<2x1024xf32>
    %11 = arith.divf %9, %10 : vector<2x1024xf32>
    %12 = arith.mulf %0, %11 : vector<2x1024xf32>
    %c0_3 = arith.constant 0 : index
    %c0_4 = arith.constant 0 : index
    %13 = vector.load %arg2[%c0_3, %c0_4] : memref<2x1024xf32, #tpu.memory_space<vmem>>, vector<2x1024xf32>
    tpu.vector_store %arg2[%c0_3, %c0_4], %12 {strides = array<i32>} : memref<2x1024xf32, #tpu.memory_space<vmem>>, vector<2x1024xf32>,
    return
  }
  func.func @transform_0(%arg0: i32) -> (i32, i32) {
    %c0_i32 = arith.constant 0 : i32
    %c0_i32_0 = arith.constant 0 : i32
    return %arg0, %c0_i32 : i32, i32
  }
  func.func @transform_1(%arg0: i32) -> (i32, i32) {
    %c0_i32 = arith.constant 0 : i32
    %c0_i32_0 = arith.constant 0 : i32
    return %arg0, %c0_i32 : i32, i32
  }
}

</mosaic_0001>

<llo_original>
// kernel: gelu_pallas.1
$region0: #{gelu_pallas.1}
  #allocation0 [shape = 'u32[]', space=smem, size = 0x4, offset = 0x4, fixed_abs, tag = 'smem constant byte address 0x4 - core index']
  #allocation1 [shape = 'u32[144,128]{1,0:T(1,128)}', space=vmem, size = 0x12000, scoped, tag = 'internal scratch']
  %s0 = inlined_call_operand.vmem [shape: f32[2,1024], index: 0, kind: input, shape index: {}]
  %s1 = inlined_call_operand.vmem [shape: f32[2,1024], index: 1, kind: output, shape index: {}]
  %s2 = sld [smem:[#allocation0]]
  $region14: #{gelu_pallas.1} parent=0
    _
  %s4 = ssub.s32 1, %s2
  %s5 = scalar_select 0, %s4, %s2
  // Predicated region
  $region2: #{gelu_pallas.1} parent=0 // pred_check
    _
  $region3: #{gelu_pallas.1} parent=0 // pred_check_branch
    %7 = sbr.rel (0) target = $region5
  $region4: #{gelu_pallas.1} parent=0 // pred_region
    _
  $region5: #{gelu_pallas.1} parent=0 // pred_fallthru
    _
  %v8 = vld [vmem:[%s0] sm:$0xff]
  %v9 = vld [vmem:[%s0 + $0x8] sm:$0xff]
  %v10 = vmul.f32 %v8, %v8
  %v11 = vmul.f32 %v9, %v9
  %v12 = vmul.f32 %v10, 0.7135482
  %v13 = vmul.f32 %v11, 0.7135482
  %v14 = vadd.f32 %v12, 1.5957692
  %v15 = vadd.f32 %v13, 1.5957692
  %v16 = vmul.f32 %v8, %v14
  %v17 = vmul.f32 %v9, %v15
  %v18 = vxor.u32 %v16, 2147483648
  %v19 = vxor.u32 %v17, 2147483648
  %v20 = vmul.f32 %v18, 1.442695
  %v21 = vpow.pop %v20
  %v22 = vmul.f32 %v19, 1.442695
  %v23 = vpow.pop %v22
  %v24 = vadd.f32 %v21, 1.0
  %v25 = vadd.f32 %v23, 1.0
  %v26 = vrcp.pop %v24
  %v27 = vmul.f32 1.0, %v26
  %v28 = vrcp.pop %v25
  %v29 = vmul.f32 1.0, %v28
  %v30 = vmul.f32 %v8, %v27
  %v31 = vmul.f32 %v9, %v29
  %32 = vst [vmem:[%s1] sm:$0xff] %v30
  %33 = vst [vmem:[%s1 + $0x8] sm:$0xff] %v31
  // Predicated region
  $region6: #{gelu_pallas.1} parent=0 // pred_check
    _
  $region7: #{gelu_pallas.1} parent=0 // pred_check_branch
    %35 = sbr.rel (0) target = $region9
  $region8: #{gelu_pallas.1} parent=0 // pred_region
    _
  $region9: #{gelu_pallas.1} parent=0 // pred_fallthru
    _
  // Predicated region
  $region10: #{gelu_pallas.1} parent=0 // pred_check
    _
  $region11: #{gelu_pallas.1} parent=0 // pred_check_branch
    %37 = sbr.rel (0) target = $region13
  $region12: #{gelu_pallas.1} parent=0 // pred_region
    _
  $region13: #{gelu_pallas.1} parent=0 // pred_fallthru
    _

</llo_original>
